<compile_context>
chip_gen: v7x
topology: tpu7x:2x2x1
jax: 0.10.0
libtpu: 0.0.40
codegen_flags: <defaults>
</compile_context>

<pallas_src>
import functools

import jax
import jax.numpy as jnp
import numpy as np
from jax.experimental import pallas as pl
from jax.experimental.pallas import tpu as pltpu


def _pool_kernel(hs_ref, mask_ref, out_ref, *, pooling_type: str):
    """One grid step == R batch rows.

    hs_ref   : [R, S, H] block of last_hidden_state
    mask_ref : [1, R, S] block of the (already SEP-zeroed) float mask
    out_ref  : [1, R, H] output block for these R rows
    """
    hs = hs_ref[...].astype(jnp.float32)          # [R, S, H]
    m = mask_ref[0]                               # [R, S] float32
    m3 = m[:, :, None]                            # [R, S, 1] -> broadcast over H

    if pooling_type == "mean":
        # VPU multiply + XLU sublane-sum over the sequence axis.
        sum_emb = jnp.sum(hs * m3, axis=1)                                # [R, H]
        sum_mask = jnp.maximum(jnp.sum(m, axis=1, keepdims=True), 1e-9)   # [R, 1]
        pooled = sum_emb / sum_mask
    else:  # "max"
        masked = jnp.where(m3 == 0.0, jnp.float32(-1e9), hs)
        pooled = jnp.max(masked, axis=1)                                  # [R, H]

    out_ref[0] = pooled.astype(out_ref.dtype)


def sentence_bert_forward(last_hidden_state, attention_mask, pooling_type="mean"):
    """Pallas equivalent of SentenceBert.forward (pooling over model features)."""
    assert pooling_type in ("mean", "max", "cls")
    B, S, H = last_hidden_state.shape

    if pooling_type == "cls":
        # Plain slice is already DMA-optimal; a Pallas kernel here would stream
        # the whole sequence just to copy position 0.
        return {"sentence_embedding": last_hidden_state[:, 0, :]}

    # Reproduce (hoisted out of the grid loop, once over the tiny [B, S] mask):
    #   x = (attention_mask[i] == 1).nonzero()[0][-1]; attention_mask[i][x] = 0
    am = attention_mask.astype(jnp.int32)
    idx = jnp.arange(S, dtype=jnp.int32)[None, :]                           # [1, S]
    last_one = jnp.max(jnp.where(am == 1, idx, -1), axis=1, keepdims=True)  # [B, 1]
    mask_f = jnp.where(idx == last_one, 0.0, am.astype(jnp.float32))        # [B, S]

    # Rows per grid step: as many as possible (<=8) while the double-buffered
    # hidden-state tile + a conservative allowance for the f32 intermediates
    # (cast / masked product) stays within the VMEM budget.
    itemsize = np.dtype(last_hidden_state.dtype).itemsize
    bytes_per_row = S * H * (2 * itemsize + 8)       # 2x db input + ~2x f32 temps
    vmem_budget = 24 * 1024 * 1024
    R = int(max(1, min(8, B, vmem_budget // max(1, bytes_per_row))))
    # TODO(synk): for extreme S*H where even R=1 exceeds the VMEM budget, add a
    # second ("arbitrary") grid axis over S with an accumulator scratch.

    B_pad = pl.cdiv(B, R) * R
    if B_pad != B:
        pad = B_pad - B
        last_hidden_state = jnp.pad(last_hidden_state, ((0, pad), (0, 0), (0, 0)))
        mask_f = jnp.pad(mask_f, ((0, pad), (0, 0)))
    NB = B_pad // R

    # Leading NB axis on mask/output so every block's last two dims equal the
    # full array dims (no (8,128) tiling constraint regardless of R).
    mask_blocks = mask_f.reshape(NB, R, S)

    kernel = functools.partial(_pool_kernel, pooling_type=pooling_type)
    out = pl.pallas_call(
        kernel,
        out_shape=jax.ShapeDtypeStruct((NB, R, H), last_hidden_state.dtype),
        grid_spec=pltpu.PrefetchScalarGridSpec(
            num_scalar_prefetch=0,
            grid=(NB,),
            in_specs=[
                pl.BlockSpec((R, S, H), lambda b: (b, 0, 0)),   # R-row HS tile
                pl.BlockSpec((1, R, S), lambda b: (b, 0, 0)),   # R-row mask tile
            ],
            out_specs=pl.BlockSpec((1, R, H), lambda b: (b, 0, 0)),
        ),
        compiler_params=pltpu.CompilerParams(
            dimension_semantics=("parallel",),
            vmem_limit_bytes=32 * 1024 * 1024,
        ),
    )(last_hidden_state, mask_blocks)

    emb = out.reshape(B_pad, H)[:B]
    return {"sentence_embedding": emb}


def _reference(last_hidden_state, attention_mask, pooling_type="mean"):
    """Plain-numpy re-implementation of the PyTorch forward for checking."""
    hs = np.asarray(last_hidden_state, dtype=np.float32).copy()
    mask = np.asarray(attention_mask, dtype=np.float32).copy()
    B, S, H = hs.shape
    for i in range(B):
        ones = np.nonzero(mask[i] == 1)[0]
        if ones.size > 0:
            mask[i, ones[-1]] = 0.0
    if pooling_type == "cls":
        return hs[:, 0]
    m = mask[:, :, None]
    if pooling_type == "max":
        hs[np.broadcast_to(m, hs.shape) == 0] = -1e9
        return hs.max(axis=1)
    sum_emb = (hs * m).sum(axis=1)
    sum_mask = np.clip(m.sum(axis=1), 1e-9, None)
    return sum_emb / sum_mask


if __name__ == "__main__":
    B, S, H = 2, 8, 32
    key = jax.random.PRNGKey(0)
    k_hs, _ = jax.random.split(key)

    last_hidden_state = jax.random.normal(k_hs, (B, S, H), dtype=jnp.float32)
    # row 0: full length S; row 1: length 5 (rest padding) -- deterministic mask
    lengths = jnp.array([S, 5], dtype=jnp.int32)
    attention_mask = (
        jnp.arange(S, dtype=jnp.int32)[None, :] < lengths[:, None]
    ).astype(jnp.int32)

    for ptype in ("mean", "max", "cls"):
        out = sentence_bert_forward(last_hidden_state, attention_mask, ptype)
        emb = jax.block_until_ready(out["sentence_embedding"])
        ref = _reference(last_hidden_state, attention_mask, ptype)
        np.testing.assert_allclose(np.asarray(emb), ref, rtol=1e-5, atol=1e-5)

    print("KERNEL_OK")
</pallas_src>

<mosaic_0001>
module attributes {stable_mosaic.version = 11 : i64} {
  func.func @_pool_kernel(%arg0: i32, %arg1: memref<2x8x32xf32, #tpu.memory_space<vmem>>, %arg2: memref<1x2x8xf32, #tpu.memory_space<vmem>>, %arg3: memref<1x2x32xf32, #tpu.memory_space<vmem>>) attributes {dimension_semantics = [#tpu.dimension_semantics<parallel>], iteration_bounds = array<i64: 1>, scalar_prefetch = 0 : i64, scratch_operands = 0 : i64, tpu.core_type = #tpu.core_type<tc>, window_params = [{transform_indices = @transform_0, window_bounds = array<i64: 2, 8, 32>}, {transform_indices = @transform_1, window_bounds = array<i64: 1, 2, 8>}, {transform_indices = @transform_2, window_bounds = array<i64: 1, 2, 32>}]} {
    %c0 = arith.constant 0 : index
    %c0_0 = arith.constant 0 : index
    %c0_1 = arith.constant 0 : index
    %0 = vector.load %arg1[%c0, %c0_0, %c0_1] : memref<2x8x32xf32, #tpu.memory_space<vmem>>, vector<2x8x32xf32>
    %c0_2 = arith.constant 0 : index
    %c0_3 = arith.constant 0 : index
    %c0_4 = arith.constant 0 : index
    %1 = vector.load %arg2[%c0_2, %c0_3, %c0_4] : memref<1x2x8xf32, #tpu.memory_space<vmem>>, vector<1x2x8xf32>
    %2 = vector.shape_cast %1 : vector<1x2x8xf32> to vector<2x8xf32>
    %3 = vector.shape_cast %2 : vector<2x8xf32> to vector<2x8x1xf32>
    %4 = vector.broadcast %3 : vector<2x8x1xf32> to vector<2x8x32xf32>
    %5 = arith.mulf %0, %4 : vector<2x8x32xf32>
    %cst = arith.constant dense<0.000000e+00> : vector<2x32xf32>
    %6 = vector.multi_reduction <add>, %5, %cst [1] : vector<2x8x32xf32> to vector<2x32xf32>
    %cst_5 = arith.constant dense<0.000000e+00> : vector<2xf32>
    %7 = vector.multi_reduction <add>, %2, %cst_5 [1] : vector<2x8xf32> to vector<2xf32>
    %8 = vector.shape_cast %7 : vector<2xf32> to vector<2x1xf32>
    %cst_6 = arith.constant 9.99999971E-10 : f32
    %9 = vector.broadcast %cst_6 : f32 to vector<2x1xf32>
    %10 = arith.maximumf %8, %9 : vector<2x1xf32>
    %11 = vector.broadcast %10 : vector<2x1xf32> to vector<2x32xf32>
    %12 = arith.divf %6, %11 : vector<2x32xf32>
    %c0_7 = arith.constant 0 : index
    %c0_8 = arith.constant 0 : index
    %c0_9 = arith.constant 0 : index
    %13 = vector.load %arg3[%c0_7, %c0_8, %c0_9] : memref<1x2x32xf32, #tpu.memory_space<vmem>>, vector<1x2x32xf32>
    %14 = vector.shape_cast %13 : vector<1x2x32xf32> to vector<2x32xf32>
    %15 = vector.shape_cast %12 : vector<2x32xf32> to vector<1x2x32xf32>
    tpu.vector_store %arg3[%c0_7, %c0_8, %c0_9], %15 {strides = array<i32>} : memref<1x2x32xf32, #tpu.memory_space<vmem>>, vector<1x2x32xf32>,
    return
  }
  func.func @transform_0(%arg0: i32) -> (i32, i32, i32) {
    %c0_i32 = arith.constant 0 : i32
    %c0_i32_0 = arith.constant 0 : i32
    %c0_i32_1 = arith.constant 0 : i32
    return %arg0, %c0_i32, %c0_i32_0 : i32, i32, i32
  }
  func.func @transform_1(%arg0: i32) -> (i32, i32, i32) {
    %c0_i32 = arith.constant 0 : i32
    %c0_i32_0 = arith.constant 0 : i32
    %c0_i32_1 = arith.constant 0 : i32
    return %arg0, %c0_i32, %c0_i32_0 : i32, i32, i32
  }
  func.func @transform_2(%arg0: i32) -> (i32, i32, i32) {
    %c0_i32 = arith.constant 0 : i32
    %c0_i32_0 = arith.constant 0 : i32
    %c0_i32_1 = arith.constant 0 : i32
    return %arg0, %c0_i32, %c0_i32_0 : i32, i32, i32
  }
}

</mosaic_0001>

<llo_original>
// kernel: tpu_custom_call.1
$region0: #{tpu_custom_call.1}
  #allocation0 [shape = 'u32[]', space=smem, size = 0x4, offset = 0x4, fixed_abs, tag = 'smem constant byte address 0x4 - core index']
  #allocation1 [shape = 'u32[144,128]{1,0:T(1,128)}', space=vmem, size = 0x12000, scoped, tag = 'internal scratch']
  %s0 = inlined_call_operand.hbm [shape: f32[2,8,32], index: 0, kind: input, shape index: {}]
  %s1 = inlined_call_operand.vmem [shape: f32[1,2,8], index: 1, kind: input, shape index: {}]
  %s2 = inlined_call_operand.hbm [shape: f32[1,2,32], index: 2, kind: output, shape index: {}]
  %s3 = sld [smem:[#allocation0]]
  $region22: #{tpu_custom_call.1} parent=0
    _
  %s5 = ssub.s32 1, %s3
  %s6 = scalar_select 0, %s5, %s3
  $region1: #{tpu_custom_call.1} parent=0
    #allocation2 [shape = 'u8[8192]{0}', space=vmem, size = 0x2000, scoped, tag = 'input window, operand 0, single buffered']
    #allocation3 [shape = 's32[1]{0}', space=sflag, size = 0x4, scoped, tag = 'scoped memory for tpu_custom_call.1']
    #allocation4 [shape = 's32[1]{0}', space=sflag, size = 0x4, scoped, tag = 'scoped memory for tpu_custom_call.1']
    #allocation5 [shape = 'u8[1024]{0}', space=vmem, size = 0x400, scoped, tag = 'output window, operand 0, single buffered']
    %7 = vsyncpa [#allocation3], 0
    %8 = vsyncpa [#allocation4], 0
    // Predicated region
    $region2: #{tpu_custom_call.1} parent=1 // pred_check
      _
    $region3: #{tpu_custom_call.1} parent=1 // pred_check_branch
      %10 = sbr.rel (0) target = $region5
    $region4: #{tpu_custom_call.1} parent=1 // pred_region
      %s12 = ssub.s32 256, 256
      %13 = vsyncadd [#allocation3], %s12
      %s14 = sshll.u32 [#allocation2], 4
      %s15 = int_to_ptr.vmem [resolvable:$true] %s14
      %20 = dma.hbm_to_vmem [thread:$0]  %s0, 256, %s15, [#allocation3], 128, 128, 8
    $region5: #{tpu_custom_call.1} parent=1 // pred_fallthru
      _
    // Predicated region
    $region6: #{tpu_custom_call.1} parent=1 // pred_check
      _
    $region7: #{tpu_custom_call.1} parent=1 // pred_check_branch
      %22 = sbr.rel (0) target = $region9
    $region8: #{tpu_custom_call.1} parent=1 // pred_region
      _
    $region9: #{tpu_custom_call.1} parent=1 // pred_fallthru
      _
    // Predicated region
    $region10: #{tpu_custom_call.1} parent=1 // pred_check
      _
    $region11: #{tpu_custom_call.1} parent=1 // pred_check_branch
      %24 = sbr.rel (0) target = $region13
    $region12: #{tpu_custom_call.1} parent=1 // pred_region
      %25 = dma.done [#allocation3], 256
    $region13: #{tpu_custom_call.1} parent=1 // pred_fallthru
      _
    %v26 = vld [vmem:[#allocation2] sm:$0xff]
    %v27 = vld [vmem:[#allocation2 + $0x8] sm:$0xff]
    %v28 = vld [vmem:[%s1] sm:$0x3]
    %v29 = vlaneseq
    %v30 = vshrl.u32 %v29, 7
    %v31 = vsub.s32 0, %v30
    %v32 = vrot.slane %v28, %v31
    %34 = vbcast.lane.b32.xlu0 %v32, 256
    %v35 = vpop.permute.xlu0 %34
    %v36 = vlaneseq
    %v37 = vshrl.u32 %v36, 7
    %v38 = vsub.s32 1, %v37
    %v39 = vrot.slane %v28, %v38
    %41 = vbcast.lane.b32.xlu0 %v39, 256
    %v42 = vpop.permute.xlu0 %41
    %v43 = vmul.f32 %v26, %v35
    %v44 = vmul.f32 %v27, %v42
    %vm45 = vcmask 261120
    %v46 = vsel %vm45, %v43, 0.0
    %v47 = vrot.slane %v46, 4
    %v48 = vadd.f32 %v46, %v47
    %v49 = vrot.slane %v48, 2
    %v50 = vadd.f32 %v48, %v49
    %v51 = vrot.slane %v50, 1
    %v52 = vadd.f32 %v50, %v51
    %v53 = vsel %vm45, %v44, 0.0
    %v54 = vrot.slane %v53, 4
    %v55 = vadd.f32 %v53, %v54
    %v56 = vrot.slane %v55, 2
    %v57 = vadd.f32 %v55, %v56
    %v58 = vrot.slane %v57, 1
    %v59 = vadd.f32 %v57, %v58
    %vm60 = vcmask 58368
    %v61 = vsel %vm60, %v28, 0.0
    %62 = vadd.xlane.f32.xlu0 %v61
    %v63 = vpop.xlane.xlu0 %62
    %v64 = vmax.f32 %v63, 1e-09
    %v66 = vrot.slane %v64, 1
    %v69 = vrcp.pop %v64
    %v70 = vmul.f32 %v52, %v69
    %v71 = vrcp.pop %v66
    %v72 = vmul.f32 %v59, %v71
    %v75 = vrot.slane %v72, 7
    %vm76 = vcmask 1041409
    %v77 = vsel %vm76, %v75, %v70
    %vm79 = vcmask 254976
    %80 = vst.msk [vmem:[#allocation5] sm:$0x3] %vm79, %v77
    // Predicated region
    $region14: #{tpu_custom_call.1} parent=1 // pred_check
      _
    $region15: #{tpu_custom_call.1} parent=1 // pred_check_branch
      %82 = sbr.rel (0) target = $region17
    $region16: #{tpu_custom_call.1} parent=1 // pred_region
      %s84 = ssub.s32 32, 32
      %85 = vsyncadd [#allocation4], %s84
      %s87 = sshll.u32 [#allocation5], 4
      %s88 = int_to_ptr.vmem [resolvable:$true] %s87
      %90 = dma.vmem_to_hbm [thread:$0]  %s88, 32, %s2, [#allocation4]
    $region17: #{tpu_custom_call.1} parent=1 // pred_fallthru
      _
    // Predicated region
    $region18: #{tpu_custom_call.1} parent=1 // pred_check
      _
    $region19: #{tpu_custom_call.1} parent=1 // pred_check_branch
      %92 = sbr.rel (0) target = $region21
    $region20: #{tpu_custom_call.1} parent=1 // pred_region
      %93 = dma.done [#allocation4], 32
    $region21: #{tpu_custom_call.1} parent=1 // pred_fallthru
      _
    %94 = vsyncpa [#allocation3], 1
    %95 = vsyncpa [#allocation4], 1

</llo_original>
